<compile_context>
chip_gen: v6e
topology: v6e:2x2x1
jax: 0.10.0
libtpu: 0.0.40
codegen_flags: <defaults>
</compile_context>

<pallas_src>
import functools

import jax
import jax.numpy as jnp
from jax.experimental import pallas as pl
from jax.experimental.pallas import tpu as pltpu


def _round_up(x, m):
    return (x + m - 1) // m * m


def mdn_kernel(x_ref, w1_ref, b1_ref, w2_ref, b2_ref, w3_ref, b3_ref, o_ref):
    # Fused 3-layer MLP: matmuls on the MXU (f32 accumulation), bias+sigmoid in f32 on
    # the VPU/EUP, all intermediates stay in vregs/VMEM (no HBM round-trips).
    h1 = jnp.dot(x_ref[...], w1_ref[...], preferred_element_type=jnp.float32) + b1_ref[...]
    h1 = jax.nn.sigmoid(h1)

    h2 = jnp.dot(h1.astype(w2_ref.dtype), w2_ref[...],
                 preferred_element_type=jnp.float32) + b2_ref[...]
    h2 = jax.nn.sigmoid(h2)

    out = jnp.dot(h2.astype(w3_ref.dtype), w3_ref[...],
                  preferred_element_type=jnp.float32) + b3_ref[...]
    o_ref[...] = out.astype(o_ref.dtype)


@functools.partial(jax.jit, static_argnames=("block_b", "use_bf16"))
def mdn_forward(x, params, *, block_b=4096, use_bf16=True):
    """x: [B, in_size].  params: dict of pre-transposed weights ([in,out]) and [1,out] biases."""
    w1, b1, w2, b2, w3, b3 = (
        params["w1"], params["b1"], params["w2"],
        params["b2"], params["w3"], params["b3"],
    )
    B, in_size = x.shape
    out_dim = w3.shape[1]                     # true output width = 2 * out_size

    # --- Optional bf16 inputs/weights; biases + accumulation + activations stay f32 ---
    compute_dtype = jnp.bfloat16 if use_bf16 else x.dtype
    xk = x.astype(compute_dtype)
    w1k = w1.astype(compute_dtype)
    w2k = w2.astype(compute_dtype)
    w3k = w3.astype(compute_dtype)
    b1k, b2k, b3k = (b.astype(jnp.float32) for b in (b1, b2, b3))

    # --- Batch tiling: big tile, but always >= 2 grid steps when B > 8 (v7x has 2 TCs).
    # No jnp.pad of x: cdiv grid lets Pallas handle the ragged last block.
    blk = min(block_b, _round_up(pl.cdiv(B, 2), 8))
    blk = max(8, _round_up(blk, 8))
    grid = (pl.cdiv(B, blk),)

    in_specs = [
        pl.BlockSpec((blk, in_size), lambda i: (i, 0)),       # x tile (last dim = full dim)
        pl.BlockSpec(w1k.shape, lambda i: (0, 0)),            # weights/biases resident
        pl.BlockSpec(b1k.shape, lambda i: (0, 0)),
        pl.BlockSpec(w2k.shape, lambda i: (0, 0)),
        pl.BlockSpec(b2k.shape, lambda i: (0, 0)),
        pl.BlockSpec(w3k.shape, lambda i: (0, 0)),
        pl.BlockSpec(b3k.shape, lambda i: (0, 0)),
    ]
    # True-width output: last dim == full array dim (8), no lane padding / trailing slice.
    out_specs = pl.BlockSpec((blk, out_dim), lambda i: (i, 0))

    return pl.pallas_call(
        mdn_kernel,
        out_shape=jax.ShapeDtypeStruct((B, out_dim), jnp.float32),
        grid_spec=pltpu.PrefetchScalarGridSpec(
            num_scalar_prefetch=0,
            grid=grid,
            in_specs=in_specs,
            out_specs=out_specs,
        ),
        compiler_params=pltpu.CompilerParams(
            dimension_semantics=("parallel",),
            vmem_limit_bytes=32 * 1024 * 1024,
        ),
    )(xk, w1k, b1k, w2k, b2k, w3k, b3k)


def init_mdn_params(key, in_size, out_size):
    """torch Linear(in,out) weight is [out,in]; we store the transpose [in,out].
    Uniform(-1/sqrt(fan_in), 1/sqrt(fan_in)) like PyTorch's default init."""
    dims = [(in_size, 64), (64, 128), (128, out_size * 2)]
    params = {}
    keys = jax.random.split(key, 2 * len(dims))
    for idx, (fan_in, fan_out) in enumerate(dims):
        bound = 1.0 / jnp.sqrt(float(fan_in))
        params[f"w{idx + 1}"] = jax.random.uniform(
            keys[2 * idx], (fan_in, fan_out), jnp.float32, -bound, bound)
        params[f"b{idx + 1}"] = jax.random.uniform(
            keys[2 * idx + 1], (1, fan_out), jnp.float32, -bound, bound)
    return params


def mdn_reference(x, params):
    """Pure-JAX reference of the same forward pass."""
    h = jax.nn.sigmoid(x @ params["w1"] + params["b1"])
    h = jax.nn.sigmoid(h @ params["w2"] + params["b2"])
    return h @ params["w3"] + params["b3"]


if __name__ == "__main__":
    in_size = 16      # MDN in_size
    out_size = 4      # MDN out_size -> final layer width = 2 * out_size = 8
    batch = 256       # small demo batch

    key = jax.random.PRNGKey(0)
    kx, kp = jax.random.split(key)

    x = jax.random.normal(kx, (batch, in_size), dtype=jnp.float32)
    params = init_mdn_params(kp, in_size, out_size)
    ref = mdn_reference(x, params)

    # f32 path (blk = 128 -> 2 grid steps; true-width output, no padding anywhere).
    out_f32 = jax.block_until_ready(mdn_forward(x, params, use_bf16=False))
    assert out_f32.shape == (batch, 2 * out_size)
    assert jnp.allclose(out_f32, ref, atol=2e-5, rtol=2e-5)

    # Default bf16 inputs/weights path (f32 accumulation + f32 sigmoid), looser tolerance.
    out_bf16 = jax.block_until_ready(mdn_forward(x, params))
    assert out_bf16.shape == (batch, 2 * out_size)
    assert jnp.allclose(out_bf16, ref, atol=3e-2, rtol=3e-2)

    # Ragged batch (B not a multiple of the tile): exercises the cdiv grid / masked writes.
    x_ragged = x[:100]
    ref_ragged = mdn_reference(x_ragged, params)
    out_ragged = jax.block_until_ready(mdn_forward(x_ragged, params, use_bf16=False))
    assert out_ragged.shape == (100, 2 * out_size)
    assert jnp.allclose(out_ragged, ref_ragged, atol=2e-5, rtol=2e-5)

    print("KERNEL_OK")
</pallas_src>

<mosaic_0001>
module attributes {stable_mosaic.version = 11 : i64} {
  func.func @mdn_kernel(%arg0: i32, %arg1: memref<128x16xf32, #tpu.memory_space<vmem>>, %arg2: memref<16x64xf32, #tpu.memory_space<vmem>>, %arg3: memref<1x64xf32, #tpu.memory_space<vmem>>, %arg4: memref<64x128xf32, #tpu.memory_space<vmem>>, %arg5: memref<1x128xf32, #tpu.memory_space<vmem>>, %arg6: memref<128x8xf32, #tpu.memory_space<vmem>>, %arg7: memref<1x8xf32, #tpu.memory_space<vmem>>, %arg8: memref<128x8xf32, #tpu.memory_space<vmem>>) attributes {dimension_semantics = [#tpu.dimension_semantics<parallel>], iteration_bounds = array<i64: 2>, scalar_prefetch = 0 : i64, scratch_operands = 0 : i64, tpu.core_type = #tpu.core_type<tc>, window_params = [{transform_indices = @transform_0, window_bounds = array<i64: 128, 16>}, {pipeline_mode = #tpu.pipeline_mode<synchronous>, transform_indices = @transform_1, window_bounds = array<i64: 16, 64>}, {pipeline_mode = #tpu.pipeline_mode<synchronous>, transform_indices = @transform_2, window_bounds = array<i64: 1, 64>}, {pipeline_mode = #tpu.pipeline_mode<synchronous>, transform_indices = @transform_3, window_bounds = array<i64: 64, 128>}, {pipeline_mode = #tpu.pipeline_mode<synchronous>, transform_indices = @transform_4, window_bounds = array<i64: 1, 128>}, {pipeline_mode = #tpu.pipeline_mode<synchronous>, transform_indices = @transform_5, window_bounds = array<i64: 128, 8>}, {pipeline_mode = #tpu.pipeline_mode<synchronous>, transform_indices = @transform_6, window_bounds = array<i64: 1, 8>}, {transform_indices = @transform_7, window_bounds = array<i64: 128, 8>}]} {
    %c0 = arith.constant 0 : index
    %c0_0 = arith.constant 0 : index
    %0 = vector.load %arg1[%c0, %c0_0] : memref<128x16xf32, #tpu.memory_space<vmem>>, vector<128x16xf32>
    %c0_1 = arith.constant 0 : index
    %c0_2 = arith.constant 0 : index
    %1 = vector.load %arg2[%c0_1, %c0_2] : memref<16x64xf32, #tpu.memory_space<vmem>>, vector<16x64xf32>
    %cst = arith.constant dense<0.000000e+00> : vector<128x64xf32>
    %2 = tpu.matmul %0, %1, %cst {dimension_numbers = #tpu.dot_dimension_numbers<[1], [0], [0], [1], [0, 0, 1, 1], [], []>} : vector<128x16xf32>, vector<16x64xf32>, vector<128x64xf32> -> vector<128x64xf32>
    %c0_3 = arith.constant 0 : index
    %c0_4 = arith.constant 0 : index
    %3 = vector.load %arg3[%c0_3, %c0_4] : memref<1x64xf32, #tpu.memory_space<vmem>>, vector<1x64xf32>
    %4 = vector.broadcast %3 : vector<1x64xf32> to vector<128x64xf32>
    %5 = arith.addf %2, %4 : vector<128x64xf32>
    %6 = arith.negf %5 : vector<128x64xf32>
    %7 = math.exp %6 : vector<128x64xf32>
    %cst_5 = arith.constant 1.000000e+00 : f32
    %8 = vector.broadcast %cst_5 : f32 to vector<128x64xf32>
    %9 = arith.addf %8, %7 : vector<128x64xf32>
    %10 = arith.divf %8, %9 : vector<128x64xf32>
    %c0_6 = arith.constant 0 : index
    %c0_7 = arith.constant 0 : index
    %11 = vector.load %arg4[%c0_6, %c0_7] : memref<64x128xf32, #tpu.memory_space<vmem>>, vector<64x128xf32>
    %cst_8 = arith.constant dense<0.000000e+00> : vector<128x128xf32>
    %12 = tpu.matmul %10, %11, %cst_8 {dimension_numbers = #tpu.dot_dimension_numbers<[1], [0], [0], [1], [0, 0, 1, 1], [], []>} : vector<128x64xf32>, vector<64x128xf32>, vector<128x128xf32> -> vector<128x128xf32>
    %c0_9 = arith.constant 0 : index
    %c0_10 = arith.constant 0 : index
    %13 = vector.load %arg5[%c0_9, %c0_10] : memref<1x128xf32, #tpu.memory_space<vmem>>, vector<1x128xf32>
    %14 = vector.broadcast %13 : vector<1x128xf32> to vector<128x128xf32>
    %15 = arith.addf %12, %14 : vector<128x128xf32>
    %16 = arith.negf %15 : vector<128x128xf32>
    %17 = math.exp %16 : vector<128x128xf32>
    %cst_11 = arith.constant 1.000000e+00 : f32
    %18 = vector.broadcast %cst_11 : f32 to vector<128x128xf32>
    %19 = arith.addf %18, %17 : vector<128x128xf32>
    %20 = arith.divf %18, %19 : vector<128x128xf32>
    %c0_12 = arith.constant 0 : index
    %c0_13 = arith.constant 0 : index
    %21 = vector.load %arg6[%c0_12, %c0_13] : memref<128x8xf32, #tpu.memory_space<vmem>>, vector<128x8xf32>
    %cst_14 = arith.constant dense<0.000000e+00> : vector<128x8xf32>
    %22 = tpu.matmul %20, %21, %cst_14 {dimension_numbers = #tpu.dot_dimension_numbers<[1], [0], [0], [1], [0, 0, 1, 1], [], []>} : vector<128x128xf32>, vector<128x8xf32>, vector<128x8xf32> -> vector<128x8xf32>
    %c0_15 = arith.constant 0 : index
    %c0_16 = arith.constant 0 : index
    %23 = vector.load %arg7[%c0_15, %c0_16] : memref<1x8xf32, #tpu.memory_space<vmem>>, vector<1x8xf32>
    %24 = vector.broadcast %23 : vector<1x8xf32> to vector<128x8xf32>
    %25 = arith.addf %22, %24 : vector<128x8xf32>
    %c0_17 = arith.constant 0 : index
    %c0_18 = arith.constant 0 : index
    %26 = vector.load %arg8[%c0_17, %c0_18] : memref<128x8xf32, #tpu.memory_space<vmem>>, vector<128x8xf32>
    tpu.vector_store %arg8[%c0_17, %c0_18], %25 {strides = array<i32>} : memref<128x8xf32, #tpu.memory_space<vmem>>, vector<128x8xf32>,
    return
  }
  func.func @transform_0(%arg0: i32) -> (i32, i32) {
    %c0_i32 = arith.constant 0 : i32
    %c0_i32_0 = arith.constant 0 : i32
    return %arg0, %c0_i32 : i32, i32
  }
  func.func @transform_1(%arg0: i32) -> (i32, i32) {
    %c0_i32 = arith.constant 0 : i32
    %c0_i32_0 = arith.constant 0 : i32
    %c0_i32_1 = arith.constant 0 : i32
    return %c0_i32, %c0_i32_0 : i32, i32
  }
  func.func @transform_2(%arg0: i32) -> (i32, i32) {
    %c0_i32 = arith.constant 0 : i32
    %c0_i32_0 = arith.constant 0 : i32
    %c0_i32_1 = arith.constant 0 : i32
    return %c0_i32, %c0_i32_0 : i32, i32
  }
  func.func @transform_3(%arg0: i32) -> (i32, i32) {
    %c0_i32 = arith.constant 0 : i32
    %c0_i32_0 = arith.constant 0 : i32
    %c0_i32_1 = arith.constant 0 : i32
    return %c0_i32, %c0_i32_0 : i32, i32
  }
  func.func @transform_4(%arg0: i32) -> (i32, i32) {
    %c0_i32 = arith.constant 0 : i32
    %c0_i32_0 = arith.constant 0 : i32
    %c0_i32_1 = arith.constant 0 : i32
    return %c0_i32, %c0_i32_0 : i32, i32
  }
  func.func @transform_5(%arg0: i32) -> (i32, i32) {
    %c0_i32 = arith.constant 0 : i32
    %c0_i32_0 = arith.constant 0 : i32
    %c0_i32_1 = arith.constant 0 : i32
    return %c0_i32, %c0_i32_0 : i32, i32
  }
  func.func @transform_6(%arg0: i32) -> (i32, i32) {
    %c0_i32 = arith.constant 0 : i32
    %c0_i32_0 = arith.constant 0 : i32
    %c0_i32_1 = arith.constant 0 : i32
    return %c0_i32, %c0_i32_0 : i32, i32
  }
  func.func @transform_7(%arg0: i32) -> (i32, i32) {
    %c0_i32 = arith.constant 0 : i32
    %c0_i32_0 = arith.constant 0 : i32
    return %arg0, %c0_i32 : i32, i32
  }
}

</mosaic_0001>

<llo_original>
// kernel: mdn_forward.1
$region0: #{mdn_forward.1}
  #allocation0 [shape = 'u32[]', space=smem, size = 0x4, offset = 0x4, fixed_abs, tag = 'smem constant byte address 0x4 - core index']
  #allocation1 [shape = 'u32[144,128]{1,0:T(1,128)}', space=vmem, size = 0x12000, scoped, tag = 'internal scratch']
  %s0 = inlined_call_operand.vmem [shape: f32[256,16], index: 0, kind: input, shape index: {}]
  %s1 = inlined_call_operand.vmem [shape: f32[16,64], index: 1, kind: input, shape index: {}]
  %s2 = inlined_call_operand.vmem [shape: f32[1,64], index: 2, kind: input, shape index: {}]
  %s3 = inlined_call_operand.vmem [shape: f32[64,128], index: 3, kind: input, shape index: {}]
  %s4 = inlined_call_operand.vmem [shape: f32[1,128], index: 4, kind: input, shape index: {}]
  %s5 = inlined_call_operand.vmem [shape: f32[128,8], index: 5, kind: input, shape index: {}]
  %s6 = inlined_call_operand.vmem [shape: f32[1,8], index: 6, kind: input, shape index: {}]
  %s7 = inlined_call_operand.vmem [shape: f32[256,8], index: 7, kind: output, shape index: {}]
  %s8 = sld [smem:[#allocation0]]
  $region61: #{mdn_forward.1} parent=0
    _
  %s10 = ssub.s32 1, %s8
  %s11 = scalar_select 0, %s10, %s8
  loop: start=0, step=1, limit=4
  $region2: #{mdn_forward.1} parent=0 // loop_pre_header
    _
  $region3: #{mdn_forward.1} parent=0 // loop_header
    %s13 = sphi 0, %s17
    %p14 = scmp.ge.s32.totalorder %s13, 4
    %s23 = sphi 0, %s25
    %s26 = sphi 0, %s23
    %s27 = sphi 0, %s26
    %s43 = sphi 0, %s27
    %s47 = sphi 0, %s47
    %s49 = sphi 0, %s47
    %s50 = sphi 0, %s49
    %s64 = sphi 0, %s50
    %s68 = sphi 0, %s68
    %s70 = sphi 0, %s68
    %s71 = sphi 0, %s70
    %s85 = sphi 0, %s71
    %s89 = sphi 0, %s89
    %s91 = sphi 0, %s89
    %s92 = sphi 0, %s91
    %s106 = sphi 0, %s92
    %s110 = sphi 0, %s110
    %s112 = sphi 0, %s110
    %s113 = sphi 0, %s112
    %s127 = sphi 0, %s113
    %s131 = sphi 0, %s131
    %s133 = sphi 0, %s131
    %s134 = sphi 0, %s133
    %s148 = sphi 0, %s134
    %s152 = sphi 0, %s152
    %s154 = sphi 0, %s152
    %s155 = sphi 0, %s154
    %s169 = sphi 0, %s155
    %s175 = sphi 0, %s177
    %s178 = sphi 0, %s175
    %s179 = sphi 0, %s178
    %s195 = sphi 0, %s179
  $region4: #{mdn_forward.1} parent=0 // loop_header_branch
    %16 = sbr.rel (%p14) target = $region8
  $region5: #{mdn_forward.1} parent=0 // loop_body
    %s18 = ssub.s32 %s13, 1
    %s19 = ssub.s32 %s13, 2
    %s20 = sadd.s32 %s13, 1
    %s21 = ssub.s32 %s13, %s20
    %p22 = scmp.eq.s32.totalorder %s21, 0
    %s24 = sadd.s32 %s23, 1
    %s25 = scalar_select %p22, %s23, %s24
    %p28 = pneg %p22
    %p29 = scmp.eq.s32.totalorder %s13, 1
    %p30 = por %p28, %p29
    %p31 = scmp.ne.s32.totalorder %s23, %s26
    %p32 = scmp.eq.s32.totalorder %s13, 0
    %p33 = por %p31, %p32
    %p34 = scmp.ne.s32.totalorder %s23, %s26
    %p35 = scmp.eq.s32.totalorder %s18, 1
    %p36 = por %p34, %p35
    %p37 = scmp.ne.s32.totalorder %s26, %s27
    %p38 = scmp.eq.s32.totalorder %s18, 0
    %p39 = por %p37, %p38
    %p40 = scmp.ne.s32.totalorder %s26, %s27
    %p41 = scmp.eq.s32.totalorder %s19, 1
    %p42 = por %p40, %p41
    %p44 = scmp.ne.s32.totalorder %s27, %s43
    %p45 = scmp.eq.s32.totalorder %s19, 0
    %p46 = por %p44, %p45
    %s48 = sadd.s32 %s47, 1
    %p51 = scmp.eq.s32.totalorder %s13, 1
    %p52 = scmp.ne.s32.totalorder %s47, %s49
    %p53 = scmp.eq.s32.totalorder %s13, 0
    %p54 = por %p52, %p53
    %p55 = scmp.ne.s32.totalorder %s47, %s49
    %p56 = scmp.eq.s32.totalorder %s18, 1
    %p57 = por %p55, %p56
    %p58 = scmp.ne.s32.totalorder %s49, %s50
    %p59 = scmp.eq.s32.totalorder %s18, 0
    %p60 = por %p58, %p59
    %p61 = scmp.ne.s32.totalorder %s49, %s50
    %p62 = scmp.eq.s32.totalorder %s19, 1
    %p63 = por %p61, %p62
    %p65 = scmp.ne.s32.totalorder %s50, %s64
    %p66 = scmp.eq.s32.totalorder %s19, 0
    %p67 = por %p65, %p66
    %s69 = sadd.s32 %s68, 1
    %p72 = scmp.eq.s32.totalorder %s13, 1
    %p73 = scmp.ne.s32.totalorder %s68, %s70
    %p74 = scmp.eq.s32.totalorder %s13, 0
    %p75 = por %p73, %p74
    %p76 = scmp.ne.s32.totalorder %s68, %s70
    %p77 = scmp.eq.s32.totalorder %s18, 1
    %p78 = por %p76, %p77
    %p79 = scmp.ne.s32.totalorder %s70, %s71
    %p80 = scmp.eq.s32.totalorder %s18, 0
    %p81 = por %p79, %p80
    %p82 = scmp.ne.s32.totalorder %s70, %s71
    %p83 = scmp.eq.s32.totalorder %s19, 1
    %p84 = por %p82, %p83
    %p86 = scmp.ne.s32.totalorder %s71, %s85
    %p87 = scmp.eq.s32.totalorder %s19, 0
    %p88 = por %p86, %p87
    %s90 = sadd.s32 %s89, 1
    %p93 = scmp.eq.s32.totalorder %s13, 1
    %p94 = scmp.ne.s32.totalorder %s89, %s91
    %p95 = scmp.eq.s32.totalorder %s13, 0
    %p96 = por %p94, %p95
    %p97 = scmp.ne.s32.totalorder %s89, %s91
    %p98 = scmp.eq.s32.totalorder %s18, 1
    %p99 = por %p97, %p98
    %p100 = scmp.ne.s32.totalorder %s91, %s92
    %p101 = scmp.eq.s32.totalorder %s18, 0
    %p102 = por %p100, %p101
    %p103 = scmp.ne.s32.totalorder %s91, %s92
    %p104 = scmp.eq.s32.totalorder %s19, 1
    %p105 = por %p103, %p104
    %p107 = scmp.ne.s32.totalorder %s92, %s106
    %p108 = scmp.eq.s32.totalorder %s19, 0
    %p109 = por %p107, %p108
    %s111 = sadd.s32 %s110, 1
    %p114 = scmp.eq.s32.totalorder %s13, 1
    %p115 = scmp.ne.s32.totalorder %s110, %s112
    %p116 = scmp.eq.s32.totalorder %s13, 0
    %p117 = por %p115, %p116
    %p118 = scmp.ne.s32.totalorder %s110, %s112
    %p119 = scmp.eq.s32.totalorder %s18, 1
    %p120 = por %p118, %p119
    %p121 = scmp.ne.s32.totalorder %s112, %s113
    %p122 = scmp.eq.s32.totalorder %s18, 0
    %p123 = por %p121, %p122
    %p124 = scmp.ne.s32.totalorder %s112, %s113
    %p125 = scmp.eq.s32.totalorder %s19, 1
    %p126 = por %p124, %p125
    %p128 = scmp.ne.s32.totalorder %s113, %s127
    %p129 = scmp.eq.s32.totalorder %s19, 0
    %p130 = por %p128, %p129
    %s132 = sadd.s32 %s131, 1
    %p135 = scmp.eq.s32.totalorder %s13, 1
    %p136 = scmp.ne.s32.totalorder %s131, %s133
    %p137 = scmp.eq.s32.totalorder %s13, 0
    %p138 = por %p136, %p137
    %p139 = scmp.ne.s32.totalorder %s131, %s133
    %p140 = scmp.eq.s32.totalorder %s18, 1
    %p141 = por %p139, %p140
    %p142 = scmp.ne.s32.totalorder %s133, %s134
    %p143 = scmp.eq.s32.totalorder %s18, 0
    %p144 = por %p142, %p143
    %p145 = scmp.ne.s32.totalorder %s133, %s134
    %p146 = scmp.eq.s32.totalorder %s19, 1
    %p147 = por %p145, %p146
    %p149 = scmp.ne.s32.totalorder %s134, %s148
    %p150 = scmp.eq.s32.totalorder %s19, 0
    %p151 = por %p149, %p150
    %s153 = sadd.s32 %s152, 1
    %p156 = scmp.eq.s32.totalorder %s13, 1
    %p157 = scmp.ne.s32.totalorder %s152, %s154
    %p158 = scmp.eq.s32.totalorder %s13, 0
    %p159 = por %p157, %p158
    %p160 = scmp.ne.s32.totalorder %s152, %s154
    %p161 = scmp.eq.s32.totalorder %s18, 1
    %p162 = por %p160, %p161
    %p163 = scmp.ne.s32.totalorder %s154, %s155
    %p164 = scmp.eq.s32.totalorder %s18, 0
    %p165 = por %p163, %p164
    %p166 = scmp.ne.s32.totalorder %s154, %s155
    %p167 = scmp.eq.s32.totalorder %s19, 1
    %p168 = por %p166, %p167
    %p170 = scmp.ne.s32.totalorder %s155, %s169
    %p171 = scmp.eq.s32.totalorder %s19, 0
    %p172 = por %p170, %p171
    %s173 = ssub.s32 %s13, %s20
    %p174 = scmp.eq.s32.totalorder %s173, 0
    %s176 = sadd.s32 %s175, 1
    %s177 = scalar_select %p174, %s175, %s176
    %p180 = pneg %p174
    %p181 = scmp.eq.s32.totalorder %s13, 1
    %p182 = por %p180, %p181
    %p183 = scmp.ne.s32.totalorder %s175, %s178
    %p184 = scmp.eq.s32.totalorder %s13, 0
    %p185 = por %p183, %p184
    %p186 = scmp.ne.s32.totalorder %s175, %s178
    %p187 = scmp.eq.s32.totalorder %s18, 1
    %p188 = por %p186, %p187
    %p189 = scmp.ne.s32.totalorder %s178, %s179
    %p190 = scmp.eq.s32.totalorder %s18, 0
    %p191 = por %p189, %p190
    %p192 = scmp.ne.s32.totalorder %s178, %s179
    %p193 = scmp.eq.s32.totalorder %s19, 1
    %p194 = por %p192, %p193
    %p196 = scmp.ne.s32.totalorder %s179, %s195
    %p197 = scmp.eq.s32.totalorder %s19, 0
    %p198 = por %p196, %p197
    %p199 = scmp.le.s32.totalorder 1, %s13
    %p200 = scmp.lt.s32.totalorder %s13, 3
    %p201 = pnand %p199, %p200
    %p202 = pneg %p201
    // Predicated region
    $region9: #{mdn_forward.1} parent=5 // pred_check
      _
    $region10: #{mdn_forward.1} parent=5 // pred_check_branch
      %204 = sbr.rel (%p201) target = $region12
    $region11: #{mdn_forward.1} parent=5 // pred_region
      %s205 = ssub.s32 %s13, 1
      // Predicated region
      $region13: #{mdn_forward.1} parent=11 // pred_check
        %p206 = pneg %p60
      $region14: #{mdn_forward.1} parent=11 // pred_check_branch
        %208 = sbr.rel (%p206) target = $region16
      $region15: #{mdn_forward.1} parent=11 // pred_region
        _
      $region16: #{mdn_forward.1} parent=11 // pred_fallthru
        _
      // Predicated region
      $region17: #{mdn_forward.1} parent=11 // pred_check
        %p209 = pneg %p81
      $region18: #{mdn_forward.1} parent=11 // pred_check_branch
        %211 = sbr.rel (%p209) target = $region20
      $region19: #{mdn_forward.1} parent=11 // pred_region
        _
      $region20: #{mdn_forward.1} parent=11 // pred_fallthru
        _
      // Predicated region
      $region21: #{mdn_forward.1} parent=11 // pred_check
        %p212 = pneg %p102
      $region22: #{mdn_forward.1} parent=11 // pred_check_branch
        %214 = sbr.rel (%p212) target = $region24
      $region23: #{mdn_forward.1} parent=11 // pred_region
        _
      $region24: #{mdn_forward.1} parent=11 // pred_fallthru
        _
      // Predicated region
      $region25: #{mdn_forward.1} parent=11 // pred_check
        %p215 = pneg %p123
      $region26: #{mdn_forward.1} parent=11 // pred_check_branch
        %217 = sbr.rel (%p215) target = $region28
      $region27: #{mdn_forward.1} parent=11 // pred_region
        _
      $region28: #{mdn_forward.1} parent=11 // pred_fallthru
        _
      // Predicated region
      $region29: #{mdn_forward.1} parent=11 // pred_check
        %p218 = pneg %p144
      $region30: #{mdn_forward.1} parent=11 // pred_check_branch
        %220 = sbr.rel (%p218) target = $region32
      $region31: #{mdn_forward.1} parent=11 // pred_region
        _
      $region32: #{mdn_forward.1} parent=11 // pred_fallthru
        _
      // Predicated region
      $region33: #{mdn_forward.1} parent=11 // pred_check
        %p221 = pneg %p165
      $region34: #{mdn_forward.1} parent=11 // pred_check_branch
        %223 = sbr.rel (%p221) target = $region36
      $region35: #{mdn_forward.1} parent=11 // pred_region
        _
      $region36: #{mdn_forward.1} parent=11 // pred_fallthru
        _
    $region12: #{mdn_forward.1} parent=5 // pred_fallthru
      _
    %p224 = scmp.lt.s32.totalorder %s13, 2
    // Predicated region
    $region37: #{mdn_forward.1} parent=5 // pred_check
      %p225 = pneg %p224
    $region38: #{mdn_forward.1} parent=5 // pred_check_branch
      %227 = sbr.rel (%p225) target = $region40
    $region39: #{mdn_forward.1} parent=5 // pred_region
      // Predicated region
      $region41: #{mdn_forward.1} parent=39 // pred_check
        %p228 = pneg %p33
      $region42: #{mdn_forward.1} parent=39 // pred_check_branch
        %230 = sbr.rel (%p228) target = $region44
      $region43: #{mdn_forward.1} parent=39 // pred_region
        %s231 = smul.u32 16, %s13
        %p232 = scmp.lt.s32.totalorder %s231, 31
        %s233 = scalar_select %p232, %s231, 31
        %s234 = smul.addr %s233, 8
        %s235 = scalar_lea.vmem %s0, %s234
        %s236 = smul.u32 16, %s13
      $region44: #{mdn_forward.1} parent=39 // pred_fallthru
        _
    $region40: #{mdn_forward.1} parent=5 // pred_fallthru
      _
    %p237 = scmp.le.s32.totalorder 1, %s13
    %p238 = scmp.lt.s32.totalorder %s13, 3
    %p239 = pnand %p237, %p238
    %p240 = pneg %p239
    // Predicated region
    $region45: #{mdn_forward.1} parent=5 // pred_check
      _
    $region46: #{mdn_forward.1} parent=5 // pred_check_branch
      %242 = sbr.rel (%p239) target = $region48
    $region47: #{mdn_forward.1} parent=5 // pred_region
      %s243 = ssub.s32 %s13, 1
      %s244 = smul.u32 16, %s18
      %p245 = scmp.lt.s32.totalorder %s244, 31
      %s246 = scalar_select %p245, %s244, 31
      %s247 = smul.addr %s246, 8
      %s248 = scalar_lea.vmem %s0, %s247
      %p249 = pneg %p39
      %p250 = pneg %p36
      %p251 = pneg %p60
      %p252 = pneg %p57
      %p253 = pneg %p81
      %p254 = pneg %p78
      %p255 = pneg %p102
      %p256 = pneg %p99
      %p257 = pneg %p123
      %p258 = pneg %p120
      %p259 = pneg %p144
      %p260 = pneg %p141
      %p261 = pneg %p165
      %p262 = pneg %p162
      %p263 = pneg %p191
      %p264 = pneg %p188
      %s265 = smul.u32 16, %s18
      %p266 = scmp.lt.s32.totalorder %s265, 31
      %s267 = scalar_select %p266, %s265, 31
      %s268 = smul.addr %s267, 8
      %s269 = scalar_lea.vmem %s7, %s268
      %s270 = smul.u32 16, %s18
      %p271 = scmp.lt.s32.totalorder %s270, 31
      %s272 = scalar_select %p271, %s270, 31
      %s273 = smul.addr %s272, 8
      %s274 = scalar_lea.vmem %s0, %s273
      %s275 = smul.u32 16, %s18
      %s276 = smul.u32 16, %s18
      %p277 = scmp.lt.s32.totalorder %s276, 31
      %s278 = scalar_select %p277, %s276, 31
      %s279 = smul.addr %s278, 8
      %s280 = scalar_lea.vmem %s7, %s279
      %s281 = smul.u32 16, %s18
      %v282 = vld [vmem:[%s274] sm:$0xff]
      %v283 = vld [vmem:[%s274 + $0x8] sm:$0xff]
      %v284 = vld [vmem:[%s274 + $0x10] sm:$0xff]
      %v285 = vld [vmem:[%s274 + $0x18] sm:$0xff]
      %v286 = vld [vmem:[%s274 + $0x20] sm:$0xff]
      %v287 = vld [vmem:[%s274 + $0x28] sm:$0xff]
      %v288 = vld [vmem:[%s274 + $0x30] sm:$0xff]
      %v289 = vld [vmem:[%s274 + $0x38] sm:$0xff]
      %v290 = vld [vmem:[%s274 + $0x40] sm:$0xff]
      %v291 = vld [vmem:[%s274 + $0x48] sm:$0xff]
      %v292 = vld [vmem:[%s274 + $0x50] sm:$0xff]
      %v293 = vld [vmem:[%s274 + $0x58] sm:$0xff]
      %v294 = vld [vmem:[%s274 + $0x60] sm:$0xff]
      %v295 = vld [vmem:[%s274 + $0x68] sm:$0xff]
      %v296 = vld [vmem:[%s274 + $0x70] sm:$0xff]
      %v297 = vld [vmem:[%s274 + $0x78] sm:$0xff]
      %v298 = vld [vmem:[%s1] sm:$0xff]
      %v299 = vld [vmem:[%s1 + $0x8] sm:$0xff]
      %v300 = vld [vmem:[%s2] sm:$0x1]
      %v302 = vlaneseq
      %v303 = vshrl.u32 %v302, 7
      %v304 = vsub.s32 0, %v303
      %v305 = vrot.slane %v300, %v304
      %vm307 = vcmask 130048
      %v309 = vsel %vm307, %v282, 0
      %v312 = vsel %vm307, %v283, 0
      %v315 = vsel %vm307, %v284, 0
      %v318 = vsel %vm307, %v285, 0
      %v321 = vsel %vm307, %v286, 0
      %v324 = vsel %vm307, %v287, 0
      %v327 = vsel %vm307, %v288, 0
      %v330 = vsel %vm307, %v289, 0
      %v333 = vsel %vm307, %v290, 0
      %v336 = vsel %vm307, %v291, 0
      %v339 = vsel %vm307, %v292, 0
      %v342 = vsel %vm307, %v293, 0
      %v345 = vsel %vm307, %v294, 0
      %v348 = vsel %vm307, %v295, 0
      %v351 = vsel %vm307, %v296, 0
      %v354 = vsel %vm307, %v297, 0
      %356 = vmatprep.subr.mxu0 0.0
      %357 = vmatpush1.msra.mxu0 0.0
      %358 = vmatprep.subr.mxu0 0.0
      %359 = vmatpush1.msra.mxu0 0.0
      %360 = vmatprep.subr.mxu0 0.0
      %361 = vmatpush1.msra.mxu0 0.0
      %362 = vmatprep.subr.mxu0 0.0
      %363 = vmatpush1.msra.mxu0 0.0
      %364 = vmatprep.subr.mxu0 0.0
      %365 = vmatpush1.msra.mxu0 0.0
      %366 = vmatprep.subr.mxu0 0.0
      %367 = vmatpush1.msra.mxu0 0.0
      %368 = vmatprep.subr.mxu0 0.0
      %369 = vmatpush1.msra.mxu0 0.0
      %370 = vmatprep.subr.mxu0 0.0
      %371 = vmatpush1.msra.mxu0 0.0
      %372 = vmatprep.subr.mxu0 0.0
      %373 = vmatpush1.msra.mxu0 0.0
      %374 = vmatprep.subr.mxu0 0.0
      %375 = vmatpush1.msra.mxu0 0.0
      %376 = vmatprep.subr.mxu0 0.0
      %377 = vmatpush1.msra.mxu0 0.0
      %378 = vmatprep.subr.mxu0 0.0
      %379 = vmatpush1.msra.mxu0 0.0
      %380 = vmatprep.subr.mxu0 0.0
      %381 = vmatpush1.msra.mxu0 0.0
      %382 = vmatprep.subr.mxu0 0.0
      %383 = vmatpush1.msra.mxu0 0.0
      %384 = vmatprep.subr.mxu0 0.0
      %385 = vmatpush1.msra.mxu0 %v299
      %386 = vmatprep.subr.mxu0 0.0
      %387 = vmatpush1.msra.mxu0 %v298
      %388 = vmatprep.subr.mxu0 0.0
      %389 = vmatpush2.msra.mxu0 0.0
      %390 = vmatprep.subr.mxu0 0.0
      %391 = vmatpush2.msra.mxu0 0.0
      %392 = vmatprep.subr.mxu0 0.0
      %393 = vmatpush2.msra.mxu0 0.0
      %394 = vmatprep.subr.mxu0 0.0
      %395 = vmatpush2.msra.mxu0 0.0
      %396 = vmatprep.subr.mxu0 0.0
      %397 = vmatpush2.msra.mxu0 0.0
      %398 = vmatprep.subr.mxu0 0.0
      %399 = vmatpush2.msra.mxu0 0.0
      %400 = vmatprep.subr.mxu0 0.0
      %401 = vmatpush2.msra.mxu0 0.0
      %402 = vmatprep.subr.mxu0 0.0
      %403 = vmatpush2.msra.mxu0 0.0
      %404 = vmatprep.subr.mxu0 0.0
      %405 = vmatpush2.msra.mxu0 0.0
      %406 = vmatprep.subr.mxu0 0.0
      %407 = vmatpush2.msra.mxu0 0.0
      %408 = vmatprep.subr.mxu0 0.0
      %409 = vmatpush2.msra.mxu0 0.0
      %410 = vmatprep.subr.mxu0 0.0
      %411 = vmatpush2.msra.mxu0 0.0
      %412 = vmatprep.subr.mxu0 0.0
      %413 = vmatpush2.msra.mxu0 0.0
      %414 = vmatprep.subr.mxu0 0.0
      %415 = vmatpush2.msra.mxu0 0.0
      %416 = vmatprep.subr.mxu0 0.0
      %417 = vmatpush2.msra.mxu0 0.0
      %418 = vmatprep.subr.mxu0 0.0
      %419 = vmatpush2.msra.mxu0 0.0
      %420 = vmatprep.mubr.f32.mxu0 0.0
      %421 = vmatmul.mubr.f32.gmra.mxu0 %v309
      %v422 = vpop.f32.mrf.mxu0
      %v423 = vadd.f32 %v305, %v422
      %v424 = vpop.f32.mrf.mxu0
      %425 = vmatprep.mubr.f32.mxu0 0.0
      %426 = vmatmul.mubr.f32.gmra.mxu0 %v312
      %v427 = vpop.f32.mrf.mxu0
      %v428 = vadd.f32 %v305, %v427
      %v429 = vpop.f32.mrf.mxu0
      %430 = vmatprep.mubr.f32.mxu0 0.0
      %431 = vmatmul.mubr.f32.gmra.mxu0 %v315
      %v432 = vpop.f32.mrf.mxu0
      %v433 = vadd.f32 %v305, %v432
      %v434 = vpop.f32.mrf.mxu0
      %435 = vmatprep.mubr.f32.mxu0 0.0
      %436 = vmatmul.mubr.f32.gmra.mxu0 %v318
      %v437 = vpop.f32.mrf.mxu0
      %v438 = vadd.f32 %v305, %v437
      %v439 = vpop.f32.mrf.mxu0
      %440 = vmatprep.mubr.f32.mxu0 0.0
      %441 = vmatmul.mubr.f32.gmra.mxu0 %v321
      %v442 = vpop.f32.mrf.mxu0
      %v443 = vadd.f32 %v305, %v442
      %v444 = vpop.f32.mrf.mxu0
      %445 = vmatprep.mubr.f32.mxu0 0.0
      %446 = vmatmul.mubr.f32.gmra.mxu0 %v324
      %v447 = vpop.f32.mrf.mxu0
      %v448 = vadd.f32 %v305, %v447
      %v449 = vpop.f32.mrf.mxu0
      %450 = vmatprep.mubr.f32.mxu0 0.0
      %451 = vmatmul.mubr.f32.gmra.mxu0 %v327
      %v452 = vpop.f32.mrf.mxu0
      %v453 = vadd.f32 %v305, %v452
      %v454 = vpop.f32.mrf.mxu0
      %455 = vmatprep.mubr.f32.mxu0 0.0
      %456 = vmatmul.mubr.f32.gmra.mxu0 %v330
      %v457 = vpop.f32.mrf.mxu0
      %v458 = vadd.f32 %v305, %v457
      %v459 = vpop.f32.mrf.mxu0
      %460 = vmatprep.mubr.f32.mxu0 0.0
      %461 = vmatmul.mubr.f32.gmra.mxu0 %v333
      %v462 = vpop.f32.mrf.mxu0
      %v463 = vadd.f32 %v305, %v462
      %v464 = vpop.f32.mrf.mxu0
      %465 = vmatprep.mubr.f32.mxu0 0.0
      %466 = vmatmul.mubr.f32.gmra.mxu0 %v336
      %v467 = vpop.f32.mrf.mxu0
      %v468 = vadd.f32 %v305, %v467
      %v469 = vpop.f32.mrf.mxu0
      %470 = vmatprep.mubr.f32.mxu0 0.0
      %471 = vmatmul.mubr.f32.gmra.mxu0 %v339
      %v472 = vpop.f32.mrf.mxu0
      %v473 = vadd.f32 %v305, %v472
      %v474 = vpop.f32.mrf.mxu0
      %475 = vmatprep.mubr.f32.mxu0 0.0
      %476 = vmatmul.mubr.f32.gmra.mxu0 %v342
      %v477 = vpop.f32.mrf.mxu0
      %v478 = vadd.f32 %v305, %v477
      %v479 = vpop.f32.mrf.mxu0
      %480 = vmatprep.mubr.f32.mxu0 0.0
      %481 = vmatmul.mubr.f32.gmra.mxu0 %v345
      %v482 = vpop.f32.mrf.mxu0
      %v483 = vadd.f32 %v305, %v482
      %v484 = vpop.f32.mrf.mxu0
      %485 = vmatprep.mubr.f32.mxu0 0.0
      %486 = vmatmul.mubr.f32.gmra.mxu0 %v348
      %v487 = vpop.f32.mrf.mxu0
      %v488 = vadd.f32 %v305, %v487
      %v489 = vpop.f32.mrf.mxu0
      %490 = vmatprep.mubr.f32.mxu0 0.0
      %491 = vmatmul.mubr.f32.gmra.mxu0 %v351
      %v492 = vpop.f32.mrf.mxu0
      %v493 = vadd.f32 %v305, %v492
      %v494 = vpop.f32.mrf.mxu0
      %495 = vmatprep.mubr.f32.mxu0 0.0
      %496 = vmatmul.mubr.f32.gmra.mxu0 %v354
      %v497 = vpop.f32.mrf.mxu0
      %v498 = vadd.f32 %v305, %v497
      %v499 = vpop.f32.mrf.mxu0
      %500 = vdwg.mxu0
      %v501 = vxor.u32 %v423, 2147483648
      %v502 = vxor.u32 %v428, 2147483648
      %v503 = vxor.u32 %v433, 2147483648
      %v504 = vxor.u32 %v438, 2147483648
      %v505 = vxor.u32 %v443, 2147483648
      %v506 = vxor.u32 %v448, 2147483648
      %v507 = vxor.u32 %v453, 2147483648
      %v508 = vxor.u32 %v458, 2147483648
      %v509 = vxor.u32 %v463, 2147483648
      %v510 = vxor.u32 %v468, 2147483648
      %v511 = vxor.u32 %v473, 2147483648
      %v512 = vxor.u32 %v478, 2147483648
      %v513 = vxor.u32 %v483, 2147483648
      %v514 = vxor.u32 %v488, 2147483648
      %v515 = vxor.u32 %v493, 2147483648
      %v516 = vxor.u32 %v498, 2147483648
      %v517 = vmul.f32 %v501, 1.442695
      %v518 = vpow.pop %v517
      %v519 = vmul.f32 %v502, 1.442695
      %v520 = vpow.pop %v519
      %v521 = vmul.f32 %v503, 1.442695
      %v522 = vpow.pop %v521
      %v523 = vmul.f32 %v504, 1.442695
      %v524 = vpow.pop %v523
      %v525 = vmul.f32 %v505, 1.442695
      %v526 = vpow.pop %v525
      %v527 = vmul.f32 %v506, 1.442695
      %v528 = vpow.pop %v527
      %v529 = vmul.f32 %v507, 1.442695
      %v530 = vpow.pop %v529
      %v531 = vmul.f32 %v508, 1.442695
      %v532 = vpow.pop %v531
      %v533 = vmul.f32 %v509, 1.442695
      %v534 = vpow.pop %v533
      %v535 = vmul.f32 %v510, 1.442695
      %v536 = vpow.pop %v535
      %v537 = vmul.f32 %v511, 1.442695
      %v538 = vpow.pop %v537
      %v539 = vmul.f32 %v512, 1.442695
      %v540 = vpow.pop %v539
      %v541 = vmul.f32 %v513, 1.442695
      %v542 = vpow.pop %v541
      %v543 = vmul.f32 %v514, 1.442695
      %v544 = vpow.pop %v543
      %v545 = vmul.f32 %v515, 1.442695
      %v546 = vpow.pop %v545
      %v547 = vmul.f32 %v516, 1.442695
      %v548 = vpow.pop %v547
      %v549 = vadd.f32 %v518, 1.0
      %v550 = vadd.f32 %v520, 1.0
      %v551 = vadd.f32 %v522, 1.0
      %v552 = vadd.f32 %v524, 1.0
      %v553 = vadd.f32 %v526, 1.0
      %v554 = vadd.f32 %v528, 1.0
      %v555 = vadd.f32 %v530, 1.0
      %v556 = vadd.f32 %v532, 1.0
      %v557 = vadd.f32 %v534, 1.0
      %v558 = vadd.f32 %v536, 1.0
      %v559 = vadd.f32 %v538, 1.0
      %v560 = vadd.f32 %v540, 1.0
      %v561 = vadd.f32 %v542, 1.0
      %v562 = vadd.f32 %v544, 1.0
      %v563 = vadd.f32 %v546, 1.0
      %v564 = vadd.f32 %v548, 1.0
      %v565 = vrcp.pop %v549
      %v566 = vmul.f32 1.0, %v565
      %v567 = vrcp.pop %v550
      %v568 = vmul.f32 1.0, %v567
      %v569 = vrcp.pop %v551
      %v570 = vmul.f32 1.0, %v569
      %v571 = vrcp.pop %v552
      %v572 = vmul.f32 1.0, %v571
      %v573 = vrcp.pop %v553
      %v574 = vmul.f32 1.0, %v573
      %v575 = vrcp.pop %v554
      %v576 = vmul.f32 1.0, %v575
      %v577 = vrcp.pop %v555
      %v578 = vmul.f32 1.0, %v577
      %v579 = vrcp.pop %v556
      %v580 = vmul.f32 1.0, %v579
      %v581 = vrcp.pop %v557
      %v582 = vmul.f32 1.0, %v581
      %v583 = vrcp.pop %v558
      %v584 = vmul.f32 1.0, %v583
      %v585 = vrcp.pop %v559
      %v586 = vmul.f32 1.0, %v585
      %v587 = vrcp.pop %v560
      %v588 = vmul.f32 1.0, %v587
      %v589 = vrcp.pop %v561
      %v590 = vmul.f32 1.0, %v589
      %v591 = vrcp.pop %v562
      %v592 = vmul.f32 1.0, %v591
      %v593 = vrcp.pop %v563
      %v594 = vmul.f32 1.0, %v593
      %v595 = vrcp.pop %v564
      %v596 = vmul.f32 1.0, %v595
      %v597 = vld [vmem:[%s3] sm:$0xff]
      %v598 = vld [vmem:[%s3 + $0x8] sm:$0xff]
      %v599 = vld [vmem:[%s3 + $0x10] sm:$0xff]
      %v600 = vld [vmem:[%s3 + $0x18] sm:$0xff]
      %v601 = vld [vmem:[%s3 + $0x20] sm:$0xff]
      %v602 = vld [vmem:[%s3 + $0x28] sm:$0xff]
      %v603 = vld [vmem:[%s3 + $0x30] sm:$0xff]
      %v604 = vld [vmem:[%s3 + $0x38] sm:$0xff]
      %v605 = vld [vmem:[%s4] sm:$0x1]
      %v607 = vlaneseq
      %v608 = vshrl.u32 %v607, 7
      %v609 = vsub.s32 0, %v608
      %v610 = vrot.slane %v605, %v609
      %vm612 = vcmask 523264
      %v614 = vsel %vm612, %v566, 0
      %v617 = vsel %vm612, %v568, 0
      %v620 = vsel %vm612, %v570, 0
      %v623 = vsel %vm612, %v572, 0
      %v626 = vsel %vm612, %v574, 0
      %v629 = vsel %vm612, %v576, 0
      %v632 = vsel %vm612, %v578, 0
      %v635 = vsel %vm612, %v580, 0
      %v638 = vsel %vm612, %v582, 0
      %v641 = vsel %vm612, %v584, 0
      %v644 = vsel %vm612, %v586, 0
      %v647 = vsel %vm612, %v588, 0
      %v650 = vsel %vm612, %v590, 0
      %v653 = vsel %vm612, %v592, 0
      %v656 = vsel %vm612, %v594, 0
      %v659 = vsel %vm612, %v596, 0
      %661 = vmatprep.subr.mxu0 0.0
      %662 = vmatpush1.msra.mxu0 0.0
      %663 = vmatprep.subr.mxu0 0.0
      %664 = vmatpush1.msra.mxu0 0.0
      %665 = vmatprep.subr.mxu0 0.0
      %666 = vmatpush1.msra.mxu0 0.0
      %667 = vmatprep.subr.mxu0 0.0
      %668 = vmatpush1.msra.mxu0 0.0
      %669 = vmatprep.subr.mxu0 0.0
      %670 = vmatpush1.msra.mxu0 0.0
      %671 = vmatprep.subr.mxu0 0.0
      %672 = vmatpush1.msra.mxu0 0.0
      %673 = vmatprep.subr.mxu0 0.0
      %674 = vmatpush1.msra.mxu0 0.0
      %675 = vmatprep.subr.mxu0 0.0
      %676 = vmatpush1.msra.mxu0 0.0
      %677 = vmatprep.subr.mxu0 0.0
      %678 = vmatpush1.msra.mxu0 %v604
      %679 = vmatprep.subr.mxu0 0.0
      %680 = vmatpush1.msra.mxu0 %v603
      %681 = vmatprep.subr.mxu0 0.0
      %682 = vmatpush1.msra.mxu0 %v602
      %683 = vmatprep.subr.mxu0 0.0
      %684 = vmatpush1.msra.mxu0 %v601
      %685 = vmatprep.subr.mxu0 0.0
      %686 = vmatpush1.msra.mxu0 %v600
      %687 = vmatprep.subr.mxu0 0.0
      %688 = vmatpush1.msra.mxu0 %v599
      %689 = vmatprep.subr.mxu0 0.0
      %690 = vmatpush1.msra.mxu0 %v598
      %691 = vmatprep.subr.mxu0 0.0
      %692 = vmatpush1.msra.mxu0 %v597
      %693 = vmatprep.subr.mxu0 0.0
      %694 = vmatpush2.msra.mxu0 0.0
      %695 = vmatprep.subr.mxu0 0.0
      %696 = vmatpush2.msra.mxu0 0.0
      %697 = vmatprep.subr.mxu0 0.0
      %698 = vmatpush2.msra.mxu0 0.0
      %699 = vmatprep.subr.mxu0 0.0
      %700 = vmatpush2.msra.mxu0 0.0
      %701 = vmatprep.subr.mxu0 0.0
      %702 = vmatpush2.msra.mxu0 0.0
      %703 = vmatprep.subr.mxu0 0.0
      %704 = vmatpush2.msra.mxu0 0.0
      %705 = vmatprep.subr.mxu0 0.0
      %706 = vmatpush2.msra.mxu0 0.0
      %707 = vmatprep.subr.mxu0 0.0
      %708 = vmatpush2.msra.mxu0 0.0
      %709 = vmatprep.subr.mxu0 0.0
      %710 = vmatpush2.msra.mxu0 0.0
      %711 = vmatprep.subr.mxu0 0.0
      %712 = vmatpush2.msra.mxu0 0.0
      %713 = vmatprep.subr.mxu0 0.0
      %714 = vmatpush2.msra.mxu0 0.0
      %715 = vmatprep.subr.mxu0 0.0
      %716 = vmatpush2.msra.mxu0 0.0
      %717 = vmatprep.subr.mxu0 0.0
      %718 = vmatpush2.msra.mxu0 0.0
      %719 = vmatprep.subr.mxu0 0.0
      %720 = vmatpush2.msra.mxu0 0.0
      %721 = vmatprep.subr.mxu0 0.0
      %722 = vmatpush2.msra.mxu0 0.0
      %723 = vmatprep.subr.mxu0 0.0
      %724 = vmatpush2.msra.mxu0 0.0
      %725 = vmatprep.mubr.f32.mxu0 0.0
      %726 = vmatmul.mubr.f32.gmra.mxu0 %v614
      %v727 = vpop.f32.mrf.mxu0
      %v728 = vadd.f32 %v610, %v727
      %v729 = vpop.f32.mrf.mxu0
      %730 = vmatprep.mubr.f32.mxu0 0.0
      %731 = vmatmul.mubr.f32.gmra.mxu0 %v617
      %v732 = vpop.f32.mrf.mxu0
      %v733 = vadd.f32 %v610, %v732
      %v734 = vpop.f32.mrf.mxu0
      %735 = vmatprep.mubr.f32.mxu0 0.0
      %736 = vmatmul.mubr.f32.gmra.mxu0 %v620
      %v737 = vpop.f32.mrf.mxu0
      %v738 = vadd.f32 %v610, %v737
      %v739 = vpop.f32.mrf.mxu0
      %740 = vmatprep.mubr.f32.mxu0 0.0
      %741 = vmatmul.mubr.f32.gmra.mxu0 %v623
      %v742 = vpop.f32.mrf.mxu0
      %v743 = vadd.f32 %v610, %v742
      %v744 = vpop.f32.mrf.mxu0
      %745 = vmatprep.mubr.f32.mxu0 0.0
      %746 = vmatmul.mubr.f32.gmra.mxu0 %v626
      %v747 = vpop.f32.mrf.mxu0
      %v748 = vadd.f32 %v610, %v747
      %v749 = vpop.f32.mrf.mxu0
      %750 = vmatprep.mubr.f32.mxu0 0.0
      %751 = vmatmul.mubr.f32.gmra.mxu0 %v629
      %v752 = vpop.f32.mrf.mxu0
      %v753 = vadd.f32 %v610, %v752
      %v754 = vpop.f32.mrf.mxu0
      %755 = vmatprep.mubr.f32.mxu0 0.0
      %756 = vmatmul.mubr.f32.gmra.mxu0 %v632
      %v757 = vpop.f32.mrf.mxu0
      %v758 = vadd.f32 %v610, %v757
      %v759 = vpop.f32.mrf.mxu0
      %760 = vmatprep.mubr.f32.mxu0 0.0
      %761 = vmatmul.mubr.f32.gmra.mxu0 %v635
      %v762 = vpop.f32.mrf.mxu0
      %v763 = vadd.f32 %v610, %v762
      %v764 = vpop.f32.mrf.mxu0
      %765 = vmatprep.mubr.f32.mxu0 0.0
      %766 = vmatmul.mubr.f32.gmra.mxu0 %v638
      %v767 = vpop.f32.mrf.mxu0
      %v768 = vadd.f32 %v610, %v767
      %v769 = vpop.f32.mrf.mxu0
      %770 = vmatprep.mubr.f32.mxu0 0.0
      %771 = vmatmul.mubr.f32.gmra.mxu0 %v641
      %v772 = vpop.f32.mrf.mxu0
      %v773 = vadd.f32 %v610, %v772
      %v774 = vpop.f32.mrf.mxu0
      %775 = vmatprep.mubr.f32.mxu0 0.0
      %776 = vmatmul.mubr.f32.gmra.mxu0 %v644
      %v777 = vpop.f32.mrf.mxu0
      %v778 = vadd.f32 %v610, %v777
      %v779 = vpop.f32.mrf.mxu0
      %780 = vmatprep.mubr.f32.mxu0 0.0
      %781 = vmatmul.mubr.f32.gmra.mxu0 %v647
      %v782 = vpop.f32.mrf.mxu0
      %v783 = vadd.f32 %v610, %v782
      %v784 = vpop.f32.mrf.mxu0
      %785 = vmatprep.mubr.f32.mxu0 0.0
      %786 = vmatmul.mubr.f32.gmra.mxu0 %v650
      %v787 = vpop.f32.mrf.mxu0
      %v788 = vadd.f32 %v610, %v787
      %v789 = vpop.f32.mrf.mxu0
      %790 = vmatprep.mubr.f32.mxu0 0.0
      %791 = vmatmul.mubr.f32.gmra.mxu0 %v653
      %v792 = vpop.f32.mrf.mxu0
      %v793 = vadd.f32 %v610, %v792
      %v794 = vpop.f32.mrf.mxu0
      %795 = vmatprep.mubr.f32.mxu0 0.0
      %796 = vmatmul.mubr.f32.gmra.mxu0 %v656
      %v797 = vpop.f32.mrf.mxu0
      %v798 = vadd.f32 %v610, %v797
      %v799 = vpop.f32.mrf.mxu0
      %800 = vmatprep.mubr.f32.mxu0 0.0
      %801 = vmatmul.mubr.f32.gmra.mxu0 %v659
      %v802 = vpop.f32.mrf.mxu0
      %v803 = vadd.f32 %v610, %v802
      %v804 = vpop.f32.mrf.mxu0
      %805 = vdwg.mxu0
      %v806 = vxor.u32 %v728, 2147483648
      %v807 = vxor.u32 %v733, 2147483648
      %v808 = vxor.u32 %v738, 2147483648
      %v809 = vxor.u32 %v743, 2147483648
      %v810 = vxor.u32 %v748, 2147483648
      %v811 = vxor.u32 %v753, 2147483648
      %v812 = vxor.u32 %v758, 2147483648
      %v813 = vxor.u32 %v763, 2147483648
      %v814 = vxor.u32 %v768, 2147483648
      %v815 = vxor.u32 %v773, 2147483648
      %v816 = vxor.u32 %v778, 2147483648
      %v817 = vxor.u32 %v783, 2147483648
      %v818 = vxor.u32 %v788, 2147483648
      %v819 = vxor.u32 %v793, 2147483648
      %v820 = vxor.u32 %v798, 2147483648
      %v821 = vxor.u32 %v803, 2147483648
      %v822 = vmul.f32 %v806, 1.442695
      %v823 = vpow.pop %v822
      %v824 = vmul.f32 %v807, 1.442695
      %v825 = vpow.pop %v824
      %v826 = vmul.f32 %v808, 1.442695
      %v827 = vpow.pop %v826
      %v828 = vmul.f32 %v809, 1.442695
      %v829 = vpow.pop %v828
      %v830 = vmul.f32 %v810, 1.442695
      %v831 = vpow.pop %v830
      %v832 = vmul.f32 %v811, 1.442695
      %v833 = vpow.pop %v832
      %v834 = vmul.f32 %v812, 1.442695
      %v835 = vpow.pop %v834
      %v836 = vmul.f32 %v813, 1.442695
      %v837 = vpow.pop %v836
      %v838 = vmul.f32 %v814, 1.442695
      %v839 = vpow.pop %v838
      %v840 = vmul.f32 %v815, 1.442695
      %v841 = vpow.pop %v840
      %v842 = vmul.f32 %v816, 1.442695
      %v843 = vpow.pop %v842
      %v844 = vmul.f32 %v817, 1.442695
      %v845 = vpow.pop %v844
      %v846 = vmul.f32 %v818, 1.442695
      %v847 = vpow.pop %v846
      %v848 = vmul.f32 %v819, 1.442695
      %v849 = vpow.pop %v848
      %v850 = vmul.f32 %v820, 1.442695
      %v851 = vpow.pop %v850
      %v852 = vmul.f32 %v821, 1.442695
      %v853 = vpow.pop %v852
      %v854 = vadd.f32 %v823, 1.0
      %v855 = vadd.f32 %v825, 1.0
      %v856 = vadd.f32 %v827, 1.0
      %v857 = vadd.f32 %v829, 1.0
      %v858 = vadd.f32 %v831, 1.0
      %v859 = vadd.f32 %v833, 1.0
      %v860 = vadd.f32 %v835, 1.0
      %v861 = vadd.f32 %v837, 1.0
      %v862 = vadd.f32 %v839, 1.0
      %v863 = vadd.f32 %v841, 1.0
      %v864 = vadd.f32 %v843, 1.0
      %v865 = vadd.f32 %v845, 1.0
      %v866 = vadd.f32 %v847, 1.0
      %v867 = vadd.f32 %v849, 1.0
      %v868 = vadd.f32 %v851, 1.0
      %v869 = vadd.f32 %v853, 1.0
      %v870 = vrcp.pop %v854
      %v871 = vmul.f32 1.0, %v870
      %v872 = vrcp.pop %v855
      %v873 = vmul.f32 1.0, %v872
      %v874 = vrcp.pop %v856
      %v875 = vmul.f32 1.0, %v874
      %v876 = vrcp.pop %v857
      %v877 = vmul.f32 1.0, %v876
      %v878 = vrcp.pop %v858
      %v879 = vmul.f32 1.0, %v878
      %v880 = vrcp.pop %v859
      %v881 = vmul.f32 1.0, %v880
      %v882 = vrcp.pop %v860
      %v883 = vmul.f32 1.0, %v882
      %v884 = vrcp.pop %v861
      %v885 = vmul.f32 1.0, %v884
      %v886 = vrcp.pop %v862
      %v887 = vmul.f32 1.0, %v886
      %v888 = vrcp.pop %v863
      %v889 = vmul.f32 1.0, %v888
      %v890 = vrcp.pop %v864
      %v891 = vmul.f32 1.0, %v890
      %v892 = vrcp.pop %v865
      %v893 = vmul.f32 1.0, %v892
      %v894 = vrcp.pop %v866
      %v895 = vmul.f32 1.0, %v894
      %v896 = vrcp.pop %v867
      %v897 = vmul.f32 1.0, %v896
      %v898 = vrcp.pop %v868
      %v899 = vmul.f32 1.0, %v898
      %v900 = vrcp.pop %v869
      %v901 = vmul.f32 1.0, %v900
      %v902 = vld [vmem:[%s5] sm:$0xff]
      %v903 = vld [vmem:[%s5 + $0x8] sm:$0xff]
      %v904 = vld [vmem:[%s5 + $0x10] sm:$0xff]
      %v905 = vld [vmem:[%s5 + $0x18] sm:$0xff]
      %v906 = vld [vmem:[%s5 + $0x20] sm:$0xff]
      %v907 = vld [vmem:[%s5 + $0x28] sm:$0xff]
      %v908 = vld [vmem:[%s5 + $0x30] sm:$0xff]
      %v909 = vld [vmem:[%s5 + $0x38] sm:$0xff]
      %v910 = vld [vmem:[%s5 + $0x40] sm:$0xff]
      %v911 = vld [vmem:[%s5 + $0x48] sm:$0xff]
      %v912 = vld [vmem:[%s5 + $0x50] sm:$0xff]
      %v913 = vld [vmem:[%s5 + $0x58] sm:$0xff]
      %v914 = vld [vmem:[%s5 + $0x60] sm:$0xff]
      %v915 = vld [vmem:[%s5 + $0x68] sm:$0xff]
      %v916 = vld [vmem:[%s5 + $0x70] sm:$0xff]
      %v917 = vld [vmem:[%s5 + $0x78] sm:$0xff]
      %v918 = vld [vmem:[%s6] sm:$0x1]
      %v920 = vlaneseq
      %v921 = vshrl.u32 %v920, 7
      %v922 = vsub.s32 0, %v921
      %v923 = vrot.slane %v918, %v922
      %925 = vmatprep.subr.mxu0 0.0
      %926 = vmatpush1.msra.mxu0 %v917
      %927 = vmatprep.subr.mxu0 0.0
      %928 = vmatpush1.msra.mxu0 %v916
      %929 = vmatprep.subr.mxu0 0.0
      %930 = vmatpush1.msra.mxu0 %v915
      %931 = vmatprep.subr.mxu0 0.0
      %932 = vmatpush1.msra.mxu0 %v914
      %933 = vmatprep.subr.mxu0 0.0
      %934 = vmatpush1.msra.mxu0 %v913
      %935 = vmatprep.subr.mxu0 0.0
      %936 = vmatpush1.msra.mxu0 %v912
      %937 = vmatprep.subr.mxu0 0.0
      %938 = vmatpush1.msra.mxu0 %v911
      %939 = vmatprep.subr.mxu0 0.0
      %940 = vmatpush1.msra.mxu0 %v910
      %941 = vmatprep.subr.mxu0 0.0
      %942 = vmatpush1.msra.mxu0 %v909
      %943 = vmatprep.subr.mxu0 0.0
      %944 = vmatpush1.msra.mxu0 %v908
      %945 = vmatprep.subr.mxu0 0.0
      %946 = vmatpush1.msra.mxu0 %v907
      %947 = vmatprep.subr.mxu0 0.0
      %948 = vmatpush1.msra.mxu0 %v906
      %949 = vmatprep.subr.mxu0 0.0
      %950 = vmatpush1.msra.mxu0 %v905
      %951 = vmatprep.subr.mxu0 0.0
      %952 = vmatpush1.msra.mxu0 %v904
      %953 = vmatprep.subr.mxu0 0.0
      %954 = vmatpush1.msra.mxu0 %v903
      %955 = vmatprep.subr.mxu0 0.0
      %956 = vmatpush1.msra.mxu0 %v902
      %957 = vmatprep.subr.mxu0 0.0
      %958 = vmatpush2.msra.mxu0 0.0
      %959 = vmatprep.subr.mxu0 0.0
      %960 = vmatpush2.msra.mxu0 0.0
      %961 = vmatprep.subr.mxu0 0.0
      %962 = vmatpush2.msra.mxu0 0.0
      %963 = vmatprep.subr.mxu0 0.0
      %964 = vmatpush2.msra.mxu0 0.0
      %965 = vmatprep.subr.mxu0 0.0
      %966 = vmatpush2.msra.mxu0 0.0
      %967 = vmatprep.subr.mxu0 0.0
      %968 = vmatpush2.msra.mxu0 0.0
      %969 = vmatprep.subr.mxu0 0.0
      %970 = vmatpush2.msra.mxu0 0.0
      %971 = vmatprep.subr.mxu0 0.0
      %972 = vmatpush2.msra.mxu0 0.0
      %973 = vmatprep.subr.mxu0 0.0
      %974 = vmatpush2.msra.mxu0 0.0
      %975 = vmatprep.subr.mxu0 0.0
      %976 = vmatpush2.msra.mxu0 0.0
      %977 = vmatprep.subr.mxu0 0.0
      %978 = vmatpush2.msra.mxu0 0.0
      %979 = vmatprep.subr.mxu0 0.0
      %980 = vmatpush2.msra.mxu0 0.0
      %981 = vmatprep.subr.mxu0 0.0
      %982 = vmatpush2.msra.mxu0 0.0
      %983 = vmatprep.subr.mxu0 0.0
      %984 = vmatpush2.msra.mxu0 0.0
      %985 = vmatprep.subr.mxu0 0.0
      %986 = vmatpush2.msra.mxu0 0.0
      %987 = vmatprep.subr.mxu0 0.0
      %988 = vmatpush2.msra.mxu0 0.0
      %989 = vmatprep.mubr.f32.mxu0 0.0
      %990 = vmatmul.mubr.f32.gmra.mxu0 %v871
      %v991 = vpop.f32.mrf.mxu0
      %v992 = vadd.f32 %v923, %v991
      %v993 = vpop.f32.mrf.mxu0
      %994 = vmatprep.mubr.f32.mxu0 0.0
      %995 = vmatmul.mubr.f32.gmra.mxu0 %v873
      %v996 = vpop.f32.mrf.mxu0
      %v997 = vadd.f32 %v923, %v996
      %v998 = vpop.f32.mrf.mxu0
      %999 = vmatprep.mubr.f32.mxu0 0.0
      %1000 = vmatmul.mubr.f32.gmra.mxu0 %v875
      %v1001 = vpop.f32.mrf.mxu0
      %v1002 = vadd.f32 %v923, %v1001
      %v1003 = vpop.f32.mrf.mxu0
      %1004 = vmatprep.mubr.f32.mxu0 0.0
      %1005 = vmatmul.mubr.f32.gmra.mxu0 %v877
      %v1006 = vpop.f32.mrf.mxu0
      %v1007 = vadd.f32 %v923, %v1006
      %v1008 = vpop.f32.mrf.mxu0
      %1009 = vmatprep.mubr.f32.mxu0 0.0
      %1010 = vmatmul.mubr.f32.gmra.mxu0 %v879
      %v1011 = vpop.f32.mrf.mxu0
      %v1012 = vadd.f32 %v923, %v1011
      %v1013 = vpop.f32.mrf.mxu0
      %1014 = vmatprep.mubr.f32.mxu0 0.0
      %1015 = vmatmul.mubr.f32.gmra.mxu0 %v881
      %v1016 = vpop.f32.mrf.mxu0
      %v1017 = vadd.f32 %v923, %v1016
      %v1018 = vpop.f32.mrf.mxu0
      %1019 = vmatprep.mubr.f32.mxu0 0.0
      %1020 = vmatmul.mubr.f32.gmra.mxu0 %v883
      %v1021 = vpop.f32.mrf.mxu0
      %v1022 = vadd.f32 %v923, %v1021
      %v1023 = vpop.f32.mrf.mxu0
      %1024 = vmatprep.mubr.f32.mxu0 0.0
      %1025 = vmatmul.mubr.f32.gmra.mxu0 %v885
      %v1026 = vpop.f32.mrf.mxu0
      %v1027 = vadd.f32 %v923, %v1026
      %v1028 = vpop.f32.mrf.mxu0
      %1029 = vmatprep.mubr.f32.mxu0 0.0
      %1030 = vmatmul.mubr.f32.gmra.mxu0 %v887
      %v1031 = vpop.f32.mrf.mxu0
      %v1032 = vadd.f32 %v923, %v1031
      %v1033 = vpop.f32.mrf.mxu0
      %1034 = vmatprep.mubr.f32.mxu0 0.0
      %1035 = vmatmul.mubr.f32.gmra.mxu0 %v889
      %v1036 = vpop.f32.mrf.mxu0
      %v1037 = vadd.f32 %v923, %v1036
      %v1038 = vpop.f32.mrf.mxu0
      %1039 = vmatprep.mubr.f32.mxu0 0.0
      %1040 = vmatmul.mubr.f32.gmra.mxu0 %v891
      %v1041 = vpop.f32.mrf.mxu0
      %v1042 = vadd.f32 %v923, %v1041
      %v1043 = vpop.f32.mrf.mxu0
      %1044 = vmatprep.mubr.f32.mxu0 0.0
      %1045 = vmatmul.mubr.f32.gmra.mxu0 %v893
      %v1046 = vpop.f32.mrf.mxu0
      %v1047 = vadd.f32 %v923, %v1046
      %v1048 = vpop.f32.mrf.mxu0
      %1049 = vmatprep.mubr.f32.mxu0 0.0
      %1050 = vmatmul.mubr.f32.gmra.mxu0 %v895
      %v1051 = vpop.f32.mrf.mxu0
      %v1052 = vadd.f32 %v923, %v1051
      %v1053 = vpop.f32.mrf.mxu0
      %1054 = vmatprep.mubr.f32.mxu0 0.0
      %1055 = vmatmul.mubr.f32.gmra.mxu0 %v897
      %v1056 = vpop.f32.mrf.mxu0
      %v1057 = vadd.f32 %v923, %v1056
      %v1058 = vpop.f32.mrf.mxu0
      %1059 = vmatprep.mubr.f32.mxu0 0.0
      %1060 = vmatmul.mubr.f32.gmra.mxu0 %v899
      %v1061 = vpop.f32.mrf.mxu0
      %v1062 = vadd.f32 %v923, %v1061
      %v1063 = vpop.f32.mrf.mxu0
      %1064 = vmatprep.mubr.f32.mxu0 0.0
      %1065 = vmatmul.mubr.f32.gmra.mxu0 %v901
      %v1066 = vpop.f32.mrf.mxu0
      %v1067 = vadd.f32 %v923, %v1066
      %v1068 = vpop.f32.mrf.mxu0
      %1069 = vdwg.mxu0
      %vm1070 = vcmask 64512
      %1071 = vst.msk [vmem:[%s280] sm:$0xff] %vm1070, %v992
      %1072 = vst.msk [vmem:[%s280 + $0x8] sm:$0xff] %vm1070, %v997
      %1073 = vst.msk [vmem:[%s280 + $0x10] sm:$0xff] %vm1070, %v1002
      %1074 = vst.msk [vmem:[%s280 + $0x18] sm:$0xff] %vm1070, %v1007
      %1075 = vst.msk [vmem:[%s280 + $0x20] sm:$0xff] %vm1070, %v1012
      %1076 = vst.msk [vmem:[%s280 + $0x28] sm:$0xff] %vm1070, %v1017
      %1077 = vst.msk [vmem:[%s280 + $0x30] sm:$0xff] %vm1070, %v1022
      %1078 = vst.msk [vmem:[%s280 + $0x38] sm:$0xff] %vm1070, %v1027
      %1079 = vst.msk [vmem:[%s280 + $0x40] sm:$0xff] %vm1070, %v1032
      %1080 = vst.msk [vmem:[%s280 + $0x48] sm:$0xff] %vm1070, %v1037
      %1081 = vst.msk [vmem:[%s280 + $0x50] sm:$0xff] %vm1070, %v1042
      %1082 = vst.msk [vmem:[%s280 + $0x58] sm:$0xff] %vm1070, %v1047
      %1083 = vst.msk [vmem:[%s280 + $0x60] sm:$0xff] %vm1070, %v1052
      %1084 = vst.msk [vmem:[%s280 + $0x68] sm:$0xff] %vm1070, %v1057
      %1085 = vst.msk [vmem:[%s280 + $0x70] sm:$0xff] %vm1070, %v1062
      %1086 = vst.msk [vmem:[%s280 + $0x78] sm:$0xff] %vm1070, %v1067
      %s1087 = smul.u32 16, %s18
      %p1088 = scmp.lt.s32.totalorder %s1087, 31
      %s1089 = scalar_select %p1088, %s1087, 31
      %s1090 = smul.addr %s1089, 8
      %s1091 = scalar_lea.vmem %s7, %s1090
      // Predicated region
      $region49: #{mdn_forward.1} parent=47 // pred_check
        %p1092 = pneg %p188
      $region50: #{mdn_forward.1} parent=47 // pred_check_branch
        %1094 = sbr.rel (%p1092) target = $region52
      $region51: #{mdn_forward.1} parent=47 // pred_region
        %s1095 = smul.u32 16, %s18
      $region52: #{mdn_forward.1} parent=47 // pred_fallthru
        _
    $region48: #{mdn_forward.1} parent=5 // pred_fallthru
      _
    %p1096 = scmp.le.s32.totalorder 2, %s13
    // Predicated region
    $region53: #{mdn_forward.1} parent=5 // pred_check
      %p1097 = pneg %p1096
    $region54: #{mdn_forward.1} parent=5 // pred_check_branch
      %1099 = sbr.rel (%p1097) target = $region56
    $region55: #{mdn_forward.1} parent=5 // pred_region
      %s1100 = ssub.s32 %s13, 2
      // Predicated region
      $region57: #{mdn_forward.1} parent=55 // pred_check
        %p1101 = pneg %p194
      $region58: #{mdn_forward.1} parent=55 // pred_check_branch
        %1103 = sbr.rel (%p1101) target = $region60
      $region59: #{mdn_forward.1} parent=55 // pred_region
        %s1104 = smul.u32 16, %s19
        %p1105 = scmp.lt.s32.totalorder %s1104, 31
        %s1106 = scalar_select %p1105, %s1104, 31
        %s1107 = smul.addr %s1106, 8
        %s1108 = scalar_lea.vmem %s7, %s1107
      $region60: #{mdn_forward.1} parent=55 // pred_fallthru
        _
    $region56: #{mdn_forward.1} parent=5 // pred_fallthru
      _
  $region6: #{mdn_forward.1} parent=0 // loop_footer
    %s17 = sadd.s32 1, %s13
  $region7: #{mdn_forward.1} parent=0 // loop_footer_branch
    %12 = sbr.rel target = $region3
  $region8: #{mdn_forward.1} parent=0 // loop_exit
    _

</llo_original>
